<compile_context>
chip_gen: v7x
topology: tpu7x:2x2x1
jax: 0.10.0
libtpu: 0.0.40
codegen_flags: <defaults>
</compile_context>

<pallas_src>
import functools

import jax
import jax.numpy as jnp
from jax.experimental import pallas as pl
from jax.experimental.pallas import tpu as pltpu


def _normalize_kernel(scale_ref, bias_ref, x_ref, o_ref):
    # scale_ref / bias_ref: VMEM (rows, 1) f32; x_ref / o_ref: VMEM (rows, lane).
    x = x_ref[...].astype(jnp.float32)
    o_ref[...] = (x * scale_ref[...] + bias_ref[...]).astype(o_ref.dtype)


def _target_block_bytes():
    """Per-generation block budget; 4x (double-buffered in + out) must stay in scoped VMEM."""
    try:
        kind = jax.devices()[0].device_kind.lower()
    except Exception:  # pragma: no cover - conservative fallback
        return 2 << 20
    if "v7" in kind:
        return 6 << 20  # 4x <= 24 MiB, under the 32 MiB scoped default (64 MiB physical)
    if "v6" in kind:
        return 4 << 20  # 4x <= 16 MiB, under the 32 MiB scoped default
    return 2 << 20      # v5e and unknown chips: 4x <= 8 MiB, under the 16 MiB scoped default


def _plan_blocks(R, L, in_itemsize, out_itemsize, target_bytes):
    """Choose (row_blk, lane_blk, repeat, rows_total) honoring the (8, 128) rule.

    Bounds TOTAL block bytes (for the wider of in/out dtype) by target_bytes and
    keeps the sublane (row) granularity at the packing-native multiple for the
    narrower dtype (8 f32, 16 bf16, 32 int8/fp8).
    """
    itemsize = max(in_itemsize, out_itemsize)            # budget with the wider dtype
    min_rows = 8 * max(1, 4 // max(1, min(in_itemsize, out_itemsize)))

    # Lane axis: keep every block a contiguous stride-1 HBM region.  If a
    # min_rows-tall slab of the full H*W is over budget, shrink the lane block
    # (keeping it a multiple of 128) and fold the split into extra rows.
    if L % 128 == 0:
        lane = L
        while lane % 256 == 0 and min_rows * lane * itemsize > target_bytes:
            lane //= 2
    else:
        # TODO(synk): H*W not 128-aligned -> only a full-extent lane block is
        # legal; for enormous unaligned spatial dims this slab may exceed the
        # budget (would need wrapper-side padding to fix).
        lane = L
    repeat = L // lane
    rows_total = R * repeat

    # Row axis: start at the dtype-native sublane granularity and grow while
    # the total block stays in budget and still evenly divides the rows.
    if rows_total <= min_rows:
        row_blk = rows_total                              # full extent is always legal
    else:
        row_blk = min_rows
        while (rows_total % (row_blk * 2) == 0
               and row_blk * 2 * lane * itemsize <= target_bytes):
            row_blk *= 2
    return row_blk, lane, repeat, rows_total


@functools.partial(jax.jit, static_argnames=("out_dtype",))
def normalize_input(x, mean, std, out_dtype=None):
    """Pallas equivalent of NormalizeInput.forward: (x - mean[None,:,None,None]) / std[...]."""
    N, C, H, W = x.shape
    assert mean.shape == (C,) and std.shape == (C,)

    # PyTorch promotion: float32 buffers drive the result dtype (uint8/bf16 in -> f32 out).
    if out_dtype is None:
        out_dtype = jnp.result_type(x.dtype, jnp.float32)
    out_dtype = jnp.dtype(out_dtype)

    R, L = N * C, H * W
    row_blk, lane_blk, repeat, rows_total = _plan_blocks(
        R, L, x.dtype.itemsize, out_dtype.itemsize, _target_block_bytes())

    # Contiguous lane-dense view: (rows_total, lane_blk * k) with lane chunks folded into rows.
    x2 = x.reshape(rows_total, L // repeat)

    # Fold the normalization into a fused multiply-add: y = x * (1/std) + (-mean/std).
    scale_c = (1.0 / std).astype(jnp.float32)
    bias_c = (-mean / std).astype(jnp.float32)
    scale_rows = jnp.repeat(jnp.broadcast_to(scale_c, (N, C)).reshape(-1), repeat)
    bias_rows = jnp.repeat(jnp.broadcast_to(bias_c, (N, C)).reshape(-1), repeat)
    scale_rows = scale_rows.reshape(rows_total, 1)
    bias_rows = bias_rows.reshape(rows_total, 1)

    grid = (pl.cdiv(rows_total, row_blk),)

    out2 = pl.pallas_call(
        _normalize_kernel,
        out_shape=jax.ShapeDtypeStruct((rows_total, L // repeat), out_dtype),
        grid=grid,
        in_specs=[
            pl.BlockSpec((row_blk, 1), lambda i: (i, 0)),          # per-row scale
            pl.BlockSpec((row_blk, 1), lambda i: (i, 0)),          # per-row bias
            pl.BlockSpec((row_blk, lane_blk), lambda i: (i, 0)),   # x slab (contiguous in HBM)
        ],
        out_specs=pl.BlockSpec((row_blk, lane_blk), lambda i: (i, 0)),
        compiler_params=pltpu.CompilerParams(
            dimension_semantics=("parallel",),
        ),
        cost_estimate=pl.CostEstimate(
            flops=2 * R * L,
            transcendentals=0,
            bytes_accessed=R * L * (x.dtype.itemsize + out_dtype.itemsize),
        ),
    )(scale_rows, bias_rows, x2)

    return out2.reshape(N, C, H, W)


if __name__ == "__main__":
    # Parameters exactly as the module's __init__ defaults (CIFAR-10 stats, 3 channels).
    mean = jnp.asarray([0.4914, 0.4822, 0.4465], dtype=jnp.float32)
    std = jnp.asarray([0.2023, 0.1994, 0.201], dtype=jnp.float32)

    # Small deterministic NCHW input: batch=2, channels=3, spatial=16x16.
    key = jax.random.PRNGKey(0)
    x = jax.random.uniform(key, (2, 3, 16, 16), dtype=jnp.float32)

    out = jax.block_until_ready(normalize_input(x, mean, std))

    # Reference check against plain-JAX semantics of the PyTorch forward.
    ref = (x - mean.reshape(1, -1, 1, 1)) / std.reshape(1, -1, 1, 1)
    assert out.shape == x.shape and out.dtype == jnp.float32
    # Fused scale/bias form differs from sub-then-divide by ~1 ulp.
    assert jnp.allclose(out, ref, atol=1e-5, rtol=1e-5)

    print("KERNEL_OK")
</pallas_src>

<mosaic_0001>
module attributes {stable_mosaic.version = 11 : i64} {
  func.func @_normalize_kernel(%arg0: i32, %arg1: memref<6x1xf32, #tpu.memory_space<vmem>>, %arg2: memref<6x1xf32, #tpu.memory_space<vmem>>, %arg3: memref<6x256xf32, #tpu.memory_space<vmem>>, %arg4: memref<6x256xf32, #tpu.memory_space<vmem>>) attributes {dimension_semantics = [#tpu.dimension_semantics<parallel>], iteration_bounds = array<i64: 1>, scalar_prefetch = 0 : i64, scratch_operands = 0 : i64, tpu.core_type = #tpu.core_type<tc>, window_params = [{transform_indices = @transform_0, window_bounds = array<i64: 6, 1>}, {transform_indices = @transform_1, window_bounds = array<i64: 6, 1>}, {transform_indices = @transform_2, window_bounds = array<i64: 6, 256>}, {transform_indices = @transform_3, window_bounds = array<i64: 6, 256>}]} {
    %c0 = arith.constant 0 : index
    %c0_0 = arith.constant 0 : index
    %0 = vector.load %arg3[%c0, %c0_0] : memref<6x256xf32, #tpu.memory_space<vmem>>, vector<6x256xf32>
    %c0_1 = arith.constant 0 : index
    %c0_2 = arith.constant 0 : index
    %1 = vector.load %arg1[%c0_1, %c0_2] : memref<6x1xf32, #tpu.memory_space<vmem>>, vector<6x1xf32>
    %2 = vector.broadcast %1 : vector<6x1xf32> to vector<6x256xf32>
    %3 = arith.mulf %0, %2 : vector<6x256xf32>
    %c0_3 = arith.constant 0 : index
    %c0_4 = arith.constant 0 : index
    %4 = vector.load %arg2[%c0_3, %c0_4] : memref<6x1xf32, #tpu.memory_space<vmem>>, vector<6x1xf32>
    %5 = vector.broadcast %4 : vector<6x1xf32> to vector<6x256xf32>
    %6 = arith.addf %3, %5 : vector<6x256xf32>
    %c0_5 = arith.constant 0 : index
    %c0_6 = arith.constant 0 : index
    %7 = vector.load %arg4[%c0_5, %c0_6] : memref<6x256xf32, #tpu.memory_space<vmem>>, vector<6x256xf32>
    tpu.vector_store %arg4[%c0_5, %c0_6], %6 {strides = array<i32>} : memref<6x256xf32, #tpu.memory_space<vmem>>, vector<6x256xf32>,
    return
  }
  func.func @transform_0(%arg0: i32) -> (i32, i32) {
    %c0_i32 = arith.constant 0 : i32
    %c0_i32_0 = arith.constant 0 : i32
    return %arg0, %c0_i32 : i32, i32
  }
  func.func @transform_1(%arg0: i32) -> (i32, i32) {
    %c0_i32 = arith.constant 0 : i32
    %c0_i32_0 = arith.constant 0 : i32
    return %arg0, %c0_i32 : i32, i32
  }
  func.func @transform_2(%arg0: i32) -> (i32, i32) {
    %c0_i32 = arith.constant 0 : i32
    %c0_i32_0 = arith.constant 0 : i32
    return %arg0, %c0_i32 : i32, i32
  }
  func.func @transform_3(%arg0: i32) -> (i32, i32) {
    %c0_i32 = arith.constant 0 : i32
    %c0_i32_0 = arith.constant 0 : i32
    return %arg0, %c0_i32 : i32, i32
  }
}

</mosaic_0001>

<llo_original>
// kernel: normalize_input.1
$region0: #{normalize_input.1}
  #allocation0 [shape = 'u32[]', space=smem, size = 0x4, offset = 0x4, fixed_abs, tag = 'smem constant byte address 0x4 - core index']
  #allocation1 [shape = 'u32[144,128]{1,0:T(1,128)}', space=vmem, size = 0x12000, scoped, tag = 'internal scratch']
  %s0 = inlined_call_operand.vmem [shape: f32[6,1], index: 0, kind: input, shape index: {}]
  %s1 = inlined_call_operand.vmem [shape: f32[6,1], index: 1, kind: input, shape index: {}]
  %s2 = inlined_call_operand.vmem [shape: f32[6,256], index: 2, kind: input, shape index: {}]
  %s3 = inlined_call_operand.vmem [shape: f32[6,256], index: 3, kind: output, shape index: {}]
  %s4 = sld [smem:[#allocation0]]
  $region22: #{normalize_input.1} parent=0
    _
  %s6 = ssub.s32 1, %s4
  %s7 = scalar_select 0, %s6, %s4
  // Predicated region
  $region2: #{normalize_input.1} parent=0 // pred_check
    _
  $region3: #{normalize_input.1} parent=0 // pred_check_branch
    %9 = sbr.rel (0) target = $region5
  $region4: #{normalize_input.1} parent=0 // pred_region
    _
  $region5: #{normalize_input.1} parent=0 // pred_fallthru
    _
  // Predicated region
  $region6: #{normalize_input.1} parent=0 // pred_check
    _
  $region7: #{normalize_input.1} parent=0 // pred_check_branch
    %11 = sbr.rel (0) target = $region9
  $region8: #{normalize_input.1} parent=0 // pred_region
    _
  $region9: #{normalize_input.1} parent=0 // pred_fallthru
    _
  // Predicated region
  $region10: #{normalize_input.1} parent=0 // pred_check
    _
  $region11: #{normalize_input.1} parent=0 // pred_check_branch
    %13 = sbr.rel (0) target = $region13
  $region12: #{normalize_input.1} parent=0 // pred_region
    _
  $region13: #{normalize_input.1} parent=0 // pred_fallthru
    _
  %v14 = vld [vmem:[%s2] sm:$0x3f]
  %v15 = vld [vmem:[%s2 + $0x8] sm:$0x3f]
  %v16 = vld [vmem:[%s0] sm:$0x3f]
  %18 = vset.pattern.permute.xlu0 0
  %19 = vperm.xlu0 %18, %v16
  %v20 = vpop.permute.xlu0 %19
  %v22 = vmul.f32 %v14, %v20
  %v23 = vmul.f32 %v15, %v20
  %v24 = vld [vmem:[%s1] sm:$0x3f]
  %26 = vset.pattern.permute.xlu0 0
  %27 = vperm.xlu0 %26, %v24
  %v28 = vpop.permute.xlu0 %27
  %v30 = vadd.f32 %v22, %v28
  %v31 = vadd.f32 %v23, %v28
  %32 = vst [vmem:[%s3] sm:$0x3f] %v30
  %33 = vst [vmem:[%s3 + $0x8] sm:$0x3f] %v31
  // Predicated region
  $region14: #{normalize_input.1} parent=0 // pred_check
    _
  $region15: #{normalize_input.1} parent=0 // pred_check_branch
    %35 = sbr.rel (0) target = $region17
  $region16: #{normalize_input.1} parent=0 // pred_region
    _
  $region17: #{normalize_input.1} parent=0 // pred_fallthru
    _
  // Predicated region
  $region18: #{normalize_input.1} parent=0 // pred_check
    _
  $region19: #{normalize_input.1} parent=0 // pred_check_branch
    %37 = sbr.rel (0) target = $region21
  $region20: #{normalize_input.1} parent=0 // pred_region
    _
  $region21: #{normalize_input.1} parent=0 // pred_fallthru
    _

</llo_original>
